<compile_context>
chip_gen: v5e
topology: v5e:2x2
jax: 0.10.0
libtpu: 0.0.40
codegen_flags: <defaults>
</compile_context>

<pallas_src>
import jax
import jax.numpy as jnp
from jax.experimental import pallas as pl
from jax.experimental.pallas import tpu as pltpu

HIDDEN = 256  # matches nn.Linear(..., 256) in the PyTorch module


def _round_up(x, m):
    return -(-x // m) * m


# ----------------------------------------------------------------------------
# Kernel
# ----------------------------------------------------------------------------
def critic_kernel(sa_ref,                 # [tb, Kpad]        bf16 (state|action|0-pad)
                  w14_ref, b14_ref,       # [Kpad, 512] bf16, [1, 512] f32
                  w25_ref, b25_ref,       # [2, 256, 256] bf16, [1, 512] f32
                  w36_ref, b36_ref,       # [2, 256] f32,     (2,) f32 in SMEM
                  q_ref):                 # [tb, 2]           f32  (q1 | q2)
    H = HIDDEN

    # --- Layer 1, both heads fused into one [tb, 512] MXU dot (f32 accumulate).
    hg = jnp.dot(sa_ref[...], w14_ref[...], preferred_element_type=jnp.float32)
    hg = jnp.maximum(hg + b14_ref[...], 0.0)

    h1 = hg[:, :H].astype(jnp.bfloat16)   # Q1 head activations
    g1 = hg[:, H:].astype(jnp.bfloat16)   # Q2 head activations

    # --- Layer 2, per head (each exactly one 256x256 MXU pass on v6e/v7x).
    h2 = jnp.dot(h1, w25_ref[0], preferred_element_type=jnp.float32)
    h2 = jnp.maximum(h2 + b25_ref[:, :H], 0.0)
    g2 = jnp.dot(g1, w25_ref[1], preferred_element_type=jnp.float32)
    g2 = jnp.maximum(g2 + b25_ref[:, H:], 0.0)

    # --- Layer 3: 1-wide outputs as VPU multiply + lane reduction, written
    #     into a single merged [tb, 2] output block.
    q_ref[:, 0:1] = (jnp.sum(h2 * w36_ref[0:1, :], axis=-1, keepdims=True)
                     + b36_ref[0])
    q_ref[:, 1:2] = (jnp.sum(g2 * w36_ref[1:2, :], axis=-1, keepdims=True)
                     + b36_ref[1])


# ----------------------------------------------------------------------------
# Wrapper
# ----------------------------------------------------------------------------
def _pick_tile_b(batch):
    """Pick the batch tile.

    Small batches: one full-extent block (the kernel is launch-dominated
    there anyway).  Large batches: the largest tile <= 1024 that still gives
    >= 4 grid steps, so v7x's two TensorCores (grid axis is "parallel") each
    get >= 2 pipelined steps; on v5e/v6e this is still comfortably above the
    ~0.35 us/step overhead knee.
    """
    b8 = _round_up(batch, 8)
    if b8 <= 256:
        return b8
    for t in (1024, 512, 256, 128, 64):
        if -(-b8 // t) >= 4:
            return t
    return 64


def critic_forward(state, action, packed):
    """Pallas implementation of Critic.forward -> (q1, q2), each [B, 1]."""
    B, state_dim = state.shape
    action_dim = action.shape[1]
    D = state_dim + action_dim
    H = HIDDEN
    Kpad = packed["w14"].shape[0]

    tb = _pick_tile_b(B)
    n_steps = -(-B // tb)
    Bpad = n_steps * tb
    grid = (n_steps,)

    # Build the fused, K-padded, bf16 layer-1 input in XLA (tiny: ~Kpad*B*2 B).
    sa = jnp.concatenate([state, action], axis=1).astype(jnp.bfloat16)
    sa = jnp.pad(sa, ((0, Bpad - B), (0, Kpad - D)))

    in_specs = [
        pl.BlockSpec((tb, Kpad), lambda i: (i, 0)),
        # Weights/biases: constant index_maps -> DMA'd once, VMEM-resident
        # across grid steps (total ~0.3 MB, negligible on all generations).
        pl.BlockSpec((Kpad, 2 * H), lambda i: (0, 0)),
        pl.BlockSpec((1, 2 * H),    lambda i: (0, 0)),
        pl.BlockSpec((2, H, H),     lambda i: (0, 0, 0)),
        pl.BlockSpec((1, 2 * H),    lambda i: (0, 0)),
        pl.BlockSpec((2, H),        lambda i: (0, 0)),
        pl.BlockSpec(memory_space=pltpu.MemorySpace.SMEM),   # scalar biases b3|b6
    ]
    out_specs = pl.BlockSpec((tb, 2), lambda i: (i, 0))

    q = pl.pallas_call(
        critic_kernel,
        grid=grid,
        in_specs=in_specs,
        out_specs=out_specs,
        out_shape=jax.ShapeDtypeStruct((Bpad, 2), jnp.float32),
        compiler_params=pltpu.CompilerParams(
            dimension_semantics=("parallel",)),
    )(sa,
      packed["w14"], packed["b14"],
      packed["w25"], packed["b25"],
      packed["w36"], packed["b36"])

    return q[:B, 0:1], q[:B, 1:2]


# ----------------------------------------------------------------------------
# Parameter handling (run once, outside the hot path)
# ----------------------------------------------------------------------------
def init_params(key, state_dim, action_dim, hidden=HIDDEN):
    """Deterministic parameter init (PyTorch-like uniform fan-in scaling)."""
    dims = [
        ("w1", (state_dim + action_dim, hidden)), ("b1", (1, hidden)),
        ("w2", (hidden, hidden)),                 ("b2", (1, hidden)),
        ("w3", (hidden, 1)),                      ("b3", (1, 1)),
        ("w4", (state_dim + action_dim, hidden)), ("b4", (1, hidden)),
        ("w5", (hidden, hidden)),                 ("b5", (1, hidden)),
        ("w6", (hidden, 1)),                      ("b6", (1, 1)),
    ]
    params = {}
    keys = jax.random.split(key, len(dims))
    for (name, shape), k in zip(dims, keys):
        fan_in = shape[0] if name.startswith("w") else shape[1]
        bound = 1.0 / jnp.sqrt(jnp.float32(fan_in))
        params[name] = jax.random.uniform(k, shape, jnp.float32, -bound, bound)
    return params


def pack_params(params, state_dim, action_dim, weight_dtype=jnp.bfloat16):
    """Fuse/pack the 12 per-layer tensors into 6 kernel-friendly buffers."""
    D = state_dim + action_dim
    Kpad = max(16, _round_up(D, 16))   # bf16 sublane packing friendly
    w14 = jnp.concatenate([params["w1"], params["w4"]], axis=1)      # [D, 512]
    w14 = jnp.pad(w14, ((0, Kpad - D), (0, 0)))                      # [Kpad, 512]
    return {
        "w14": w14.astype(weight_dtype),                             # [Kpad, 512]
        "b14": jnp.concatenate([params["b1"], params["b4"]], axis=1
                               ).astype(jnp.float32),                # [1, 512]
        "w25": jnp.stack([params["w2"], params["w5"]], axis=0
                         ).astype(weight_dtype),                     # [2, 256, 256]
        "b25": jnp.concatenate([params["b2"], params["b5"]], axis=1
                               ).astype(jnp.float32),                # [1, 512]
        "w36": jnp.concatenate([params["w3"], params["w6"]], axis=1
                               ).T.astype(jnp.float32),              # [2, 256]
        "b36": jnp.concatenate([params["b3"].reshape(-1),
                                params["b6"].reshape(-1)]
                               ).astype(jnp.float32),                # (2,)
    }


# ----------------------------------------------------------------------------
# References
# ----------------------------------------------------------------------------
def critic_forward_ref_f32(state, action, params):
    """Pure-f32 reference (faithful to the PyTorch module)."""
    sa = jnp.concatenate([state, action], axis=1)
    h = jnp.maximum(sa @ params["w1"] + params["b1"], 0.0)
    h = jnp.maximum(h @ params["w2"] + params["b2"], 0.0)
    q1 = h @ params["w3"] + params["b3"]
    g = jnp.maximum(sa @ params["w4"] + params["b4"], 0.0)
    g = jnp.maximum(g @ params["w5"] + params["b5"], 0.0)
    q2 = g @ params["w6"] + params["b6"]
    return q1, q2


def critic_forward_ref_bf16(state, action, params):
    """Reference emulating the kernel's bf16-weight / f32-accumulate numerics."""
    bf = lambda x: x.astype(jnp.bfloat16)

    def dot(x, w):
        return jnp.dot(bf(x), bf(w), preferred_element_type=jnp.float32)

    sa = jnp.concatenate([state, action], axis=1)
    h = jnp.maximum(dot(sa, params["w1"]) + params["b1"], 0.0)
    h = jnp.maximum(dot(h, params["w2"]) + params["b2"], 0.0)
    q1 = jnp.dot(h, params["w3"], preferred_element_type=jnp.float32) + params["b3"]
    g = jnp.maximum(dot(sa, params["w4"]) + params["b4"], 0.0)
    g = jnp.maximum(dot(g, params["w5"]) + params["b5"], 0.0)
    q2 = jnp.dot(g, params["w6"], preferred_element_type=jnp.float32) + params["b6"]
    return q1, q2


# ----------------------------------------------------------------------------
if __name__ == "__main__":
    key = jax.random.PRNGKey(0)
    k_params = jax.random.fold_in(key, 123)

    state_dim, action_dim = 16, 4
    params = init_params(k_params, state_dim, action_dim)
    packed = pack_params(params, state_dim, action_dim)

    fwd = jax.jit(critic_forward)

    # 8   : tiny single-block acting path
    # 200 : single block with batch padding (200 -> 208)
    # 512 : 4-step batch-tiled grid (tb=128, both v7x cores busy)
    # 1000: 4-step grid (tb=256) with batch padding (1000 -> 1024)
    for batch in (8, 200, 512, 1000):
        k_s, k_a = jax.random.split(jax.random.fold_in(key, batch))
        state = jax.random.normal(k_s, (batch, state_dim), jnp.float32)
        action = jax.random.normal(k_a, (batch, action_dim), jnp.float32)

        q1, q2 = fwd(state, action, packed)
        jax.block_until_ready((q1, q2))

        q1_bf, q2_bf = critic_forward_ref_bf16(state, action, params)
        q1_f32, q2_f32 = critic_forward_ref_f32(state, action, params)

        assert q1.shape == (batch, 1) and q2.shape == (batch, 1)
        # Tight check vs bf16-emulating reference (same numerics as kernel).
        assert jnp.allclose(q1, q1_bf, atol=5e-3, rtol=5e-3)
        assert jnp.allclose(q2, q2_bf, atol=5e-3, rtol=5e-3)
        # Loose check vs the exact f32 module semantics.
        assert jnp.allclose(q1, q1_f32, atol=5e-2, rtol=5e-2)
        assert jnp.allclose(q2, q2_f32, atol=5e-2, rtol=5e-2)

    print("KERNEL_OK")
</pallas_src>

<mosaic_0001>
module attributes {stable_mosaic.version = 11 : i64} {
  func.func @critic_kernel(%arg0: i32, %arg1: memref<8x32xbf16, #tpu.memory_space<vmem>>, %arg2: memref<32x512xbf16, #tpu.memory_space<vmem>>, %arg3: memref<1x512xf32, #tpu.memory_space<vmem>>, %arg4: memref<2x256x256xbf16, #tpu.memory_space<vmem>>, %arg5: memref<1x512xf32, #tpu.memory_space<vmem>>, %arg6: memref<2x256xf32, #tpu.memory_space<vmem>>, %arg7: memref<2xf32, #tpu.memory_space<smem>>, %arg8: memref<8x2xf32, #tpu.memory_space<vmem>>) attributes {dimension_semantics = [#tpu.dimension_semantics<parallel>], iteration_bounds = array<i64: 1>, scalar_prefetch = 0 : i64, scratch_operands = 0 : i64, tpu.core_type = #tpu.core_type<tc>, window_params = [{transform_indices = @transform_0, window_bounds = array<i64: 8, 32>}, {pipeline_mode = #tpu.pipeline_mode<synchronous>, transform_indices = @transform_1, window_bounds = array<i64: 32, 512>}, {pipeline_mode = #tpu.pipeline_mode<synchronous>, transform_indices = @transform_2, window_bounds = array<i64: 1, 512>}, {pipeline_mode = #tpu.pipeline_mode<synchronous>, transform_indices = @transform_3, window_bounds = array<i64: 2, 256, 256>}, {pipeline_mode = #tpu.pipeline_mode<synchronous>, transform_indices = @transform_4, window_bounds = array<i64: 1, 512>}, {pipeline_mode = #tpu.pipeline_mode<synchronous>, transform_indices = @transform_5, window_bounds = array<i64: 2, 256>}, {transform_indices = @transform_6, window_bounds = array<i64: 2>}, {transform_indices = @transform_7, window_bounds = array<i64: 8, 2>}]} {
    %c0 = arith.constant 0 : index
    %c0_0 = arith.constant 0 : index
    %0 = vector.load %arg1[%c0, %c0_0] : memref<8x32xbf16, #tpu.memory_space<vmem>>, vector<8x32xbf16>
    %c0_1 = arith.constant 0 : index
    %c0_2 = arith.constant 0 : index
    %1 = vector.load %arg2[%c0_1, %c0_2] : memref<32x512xbf16, #tpu.memory_space<vmem>>, vector<32x512xbf16>
    %cst = arith.constant dense<0.000000e+00> : vector<8x512xf32>
    %2 = tpu.matmul %0, %1, %cst {dimension_numbers = #tpu.dot_dimension_numbers<[1], [0], [0], [1], [0, 0, 1, 1], [], []>} : vector<8x32xbf16>, vector<32x512xbf16>, vector<8x512xf32> -> vector<8x512xf32>
    %c0_3 = arith.constant 0 : index
    %c0_4 = arith.constant 0 : index
    %3 = vector.load %arg3[%c0_3, %c0_4] : memref<1x512xf32, #tpu.memory_space<vmem>>, vector<1x512xf32>
    %4 = vector.broadcast %3 : vector<1x512xf32> to vector<8x512xf32>
    %5 = arith.addf %2, %4 : vector<8x512xf32>
    %cst_5 = arith.constant 0.000000e+00 : f32
    %6 = vector.broadcast %cst_5 : f32 to vector<8x512xf32>
    %7 = arith.maximumf %5, %6 : vector<8x512xf32>
    %8 = vector.extract_strided_slice %7 {offsets = [0, 0], sizes = [8, 256], strides = [1, 1]} : vector<8x512xf32> to vector<8x256xf32>
    %9 = arith.truncf %8 : vector<8x256xf32> to vector<8x256xbf16>
    %10 = vector.extract_strided_slice %7 {offsets = [0, 256], sizes = [8, 256], strides = [1, 1]} : vector<8x512xf32> to vector<8x256xf32>
    %11 = arith.truncf %10 : vector<8x256xf32> to vector<8x256xbf16>
    %c0_6 = arith.constant 0 : index
    %c0_7 = arith.constant 0 : index
    %c0_8 = arith.constant 0 : index
    %12 = vector.load %arg4[%c0_6, %c0_7, %c0_8] : memref<2x256x256xbf16, #tpu.memory_space<vmem>>, vector<1x256x256xbf16>
    %13 = vector.shape_cast %12 : vector<1x256x256xbf16> to vector<256x256xbf16>
    %cst_9 = arith.constant dense<0.000000e+00> : vector<8x256xf32>
    %14 = tpu.matmul %9, %13, %cst_9 {dimension_numbers = #tpu.dot_dimension_numbers<[1], [0], [0], [1], [0, 0, 1, 1], [], []>} : vector<8x256xbf16>, vector<256x256xbf16>, vector<8x256xf32> -> vector<8x256xf32>
    %c0_10 = arith.constant 0 : index
    %c0_11 = arith.constant 0 : index
    %15 = vector.load %arg5[%c0_10, %c0_11] : memref<1x512xf32, #tpu.memory_space<vmem>>, vector<1x256xf32>
    %16 = vector.broadcast %15 : vector<1x256xf32> to vector<8x256xf32>
    %17 = arith.addf %14, %16 : vector<8x256xf32>
    %cst_12 = arith.constant 0.000000e+00 : f32
    %18 = vector.broadcast %cst_12 : f32 to vector<8x256xf32>
    %19 = arith.maximumf %17, %18 : vector<8x256xf32>
    %c1 = arith.constant 1 : index
    %c0_13 = arith.constant 0 : index
    %c0_14 = arith.constant 0 : index
    %20 = vector.load %arg4[%c1, %c0_13, %c0_14] : memref<2x256x256xbf16, #tpu.memory_space<vmem>>, vector<1x256x256xbf16>
    %21 = vector.shape_cast %20 : vector<1x256x256xbf16> to vector<256x256xbf16>
    %cst_15 = arith.constant dense<0.000000e+00> : vector<8x256xf32>
    %22 = tpu.matmul %11, %21, %cst_15 {dimension_numbers = #tpu.dot_dimension_numbers<[1], [0], [0], [1], [0, 0, 1, 1], [], []>} : vector<8x256xbf16>, vector<256x256xbf16>, vector<8x256xf32> -> vector<8x256xf32>
    %c0_16 = arith.constant 0 : index
    %c256 = arith.constant 256 : index
    %23 = vector.load %arg5[%c0_16, %c256] : memref<1x512xf32, #tpu.memory_space<vmem>>, vector<1x256xf32>
    %24 = vector.broadcast %23 : vector<1x256xf32> to vector<8x256xf32>
    %25 = arith.addf %22, %24 : vector<8x256xf32>
    %cst_17 = arith.constant 0.000000e+00 : f32
    %26 = vector.broadcast %cst_17 : f32 to vector<8x256xf32>
    %27 = arith.maximumf %25, %26 : vector<8x256xf32>
    %c0_18 = arith.constant 0 : index
    %c0_19 = arith.constant 0 : index
    %28 = vector.load %arg6[%c0_18, %c0_19] : memref<2x256xf32, #tpu.memory_space<vmem>>, vector<1x256xf32>
    %29 = vector.broadcast %28 : vector<1x256xf32> to vector<8x256xf32>
    %30 = arith.mulf %19, %29 : vector<8x256xf32>
    %cst_20 = arith.constant dense<0.000000e+00> : vector<8xf32>
    %31 = vector.multi_reduction <add>, %30, %cst_20 [1] : vector<8x256xf32> to vector<8xf32>
    %32 = vector.shape_cast %31 : vector<8xf32> to vector<8x1xf32>
    %c0_21 = arith.constant 0 : index
    %33 = memref.load %arg7[%c0_21] : memref<2xf32, #tpu.memory_space<smem>>
    %34 = vector.broadcast %33 : f32 to vector<8x1xf32>
    %35 = arith.addf %32, %34 : vector<8x1xf32>
    %c0_22 = arith.constant 0 : index
    %c0_23 = arith.constant 0 : index
    %36 = vector.load %arg8[%c0_22, %c0_23] : memref<8x2xf32, #tpu.memory_space<vmem>>, vector<8x1xf32>
    tpu.vector_store %arg8[%c0_22, %c0_23], %35 {strides = array<i32>} : memref<8x2xf32, #tpu.memory_space<vmem>>, vector<8x1xf32>,
    %c1_24 = arith.constant 1 : index
    %c0_25 = arith.constant 0 : index
    %37 = vector.load %arg6[%c1_24, %c0_25] : memref<2x256xf32, #tpu.memory_space<vmem>>, vector<1x256xf32>
    %38 = vector.broadcast %37 : vector<1x256xf32> to vector<8x256xf32>
    %39 = arith.mulf %27, %38 : vector<8x256xf32>
    %cst_26 = arith.constant dense<0.000000e+00> : vector<8xf32>
    %40 = vector.multi_reduction <add>, %39, %cst_26 [1] : vector<8x256xf32> to vector<8xf32>
    %41 = vector.shape_cast %40 : vector<8xf32> to vector<8x1xf32>
    %c1_27 = arith.constant 1 : index
    %42 = memref.load %arg7[%c1_27] : memref<2xf32, #tpu.memory_space<smem>>
    %43 = vector.broadcast %42 : f32 to vector<8x1xf32>
    %44 = arith.addf %41, %43 : vector<8x1xf32>
    %c0_28 = arith.constant 0 : index
    %c1_29 = arith.constant 1 : index
    %45 = vector.load %arg8[%c0_28, %c1_29] : memref<8x2xf32, #tpu.memory_space<vmem>>, vector<8x1xf32>
    tpu.vector_store %arg8[%c0_28, %c1_29], %44 {strides = array<i32>} : memref<8x2xf32, #tpu.memory_space<vmem>>, vector<8x1xf32>,
    return
  }
  func.func @transform_0(%arg0: i32) -> (i32, i32) {
    %c0_i32 = arith.constant 0 : i32
    %c0_i32_0 = arith.constant 0 : i32
    return %arg0, %c0_i32 : i32, i32
  }
  func.func @transform_1(%arg0: i32) -> (i32, i32) {
    %c0_i32 = arith.constant 0 : i32
    %c0_i32_0 = arith.constant 0 : i32
    %c0_i32_1 = arith.constant 0 : i32
    return %c0_i32, %c0_i32_0 : i32, i32
  }
  func.func @transform_2(%arg0: i32) -> (i32, i32) {
    %c0_i32 = arith.constant 0 : i32
    %c0_i32_0 = arith.constant 0 : i32
    %c0_i32_1 = arith.constant 0 : i32
    return %c0_i32, %c0_i32_0 : i32, i32
  }
  func.func @transform_3(%arg0: i32) -> (i32, i32, i32) {
    %c0_i32 = arith.constant 0 : i32
    %c0_i32_0 = arith.constant 0 : i32
    %c0_i32_1 = arith.constant 0 : i32
    %c0_i32_2 = arith.constant 0 : i32
    return %c0_i32, %c0_i32_0, %c0_i32_1 : i32, i32, i32
  }
  func.func @transform_4(%arg0: i32) -> (i32, i32) {
    %c0_i32 = arith.constant 0 : i32
    %c0_i32_0 = arith.constant 0 : i32
    %c0_i32_1 = arith.constant 0 : i32
    return %c0_i32, %c0_i32_0 : i32, i32
  }
  func.func @transform_5(%arg0: i32) -> (i32, i32) {
    %c0_i32 = arith.constant 0 : i32
    %c0_i32_0 = arith.constant 0 : i32
    %c0_i32_1 = arith.constant 0 : i32
    return %c0_i32, %c0_i32_0 : i32, i32
  }
  func.func @transform_6(%arg0: i32) -> i32 {
    %c0_i32 = arith.constant 0 : i32
    %c0_i32_0 = arith.constant 0 : i32
    return %c0_i32 : i32
  }
  func.func @transform_7(%arg0: i32) -> (i32, i32) {
    %c0_i32 = arith.constant 0 : i32
    %c0_i32_0 = arith.constant 0 : i32
    return %arg0, %c0_i32 : i32, i32
  }
}

</mosaic_0001>

<llo_original>
// kernel: critic_forward.1
$region0: #{critic_forward.1}
  #allocation0 [shape = 'u32[]', space=smem, size = 0x4, offset = 0x4, fixed_abs, tag = 'smem constant byte address 0x4 - core index']
  #allocation1 [shape = 'u32[72,128]{1,0:T(1,128)}', space=vmem, size = 0x9000, scoped, tag = 'internal scratch']
  %s0 = inlined_call_operand.vmem [shape: bf16[8,32], index: 0, kind: input, shape index: {}]
  %s1 = inlined_call_operand.hbm [shape: bf16[32,512], index: 1, kind: input, shape index: {}]
  %s2 = inlined_call_operand.vmem [shape: f32[1,512], index: 2, kind: input, shape index: {}]
  %s3 = inlined_call_operand.hbm [shape: bf16[2,256,256], index: 3, kind: input, shape index: {}]
  %s4 = inlined_call_operand.vmem [shape: f32[1,512], index: 4, kind: input, shape index: {}]
  %s5 = inlined_call_operand.vmem [shape: f32[2,256], index: 5, kind: input, shape index: {}]
  %s6 = inlined_call_operand.vmem [shape: f32[2], index: 6, kind: input, shape index: {}]
  %s7 = inlined_call_operand.vmem [shape: f32[8,2], index: 7, kind: output, shape index: {}]
  %s8 = sld [smem:[#allocation0]]
  $region50: #{critic_forward.1} parent=0
    _
  %s10 = ssub.s32 1, %s8
  %s11 = scalar_select 0, %s10, %s8
  $region1: #{critic_forward.1} parent=0
    #allocation2 [shape = 'u8[32768]{0}', space=vmem, size = 0x8000, scoped, tag = 'input window, operand 1, single buffered']
    #allocation3 [shape = 's32[1]{0}', space=sflag, size = 0x4, scoped, tag = 'scoped memory for critic_forward.1']
    #allocation4 [shape = 's32[1]{0}', space=sflag, size = 0x4, scoped, tag = 'scoped memory for critic_forward.1']
    #allocation5 [shape = 'u8[262144]{0}', space=vmem, size = 0x40000, scoped, tag = 'input window, operand 3, single buffered']
    #allocation6 [shape = 's32[1]{0}', space=sflag, size = 0x4, scoped, tag = 'scoped memory for critic_forward.1']
    #allocation7 [shape = 'u8[512]{0}', space=smem, size = 0x200, scoped, tag = 'input window, operand 6, single buffered']
    %12 = vsyncpa [#allocation3], 0
    %13 = vsyncpa [#allocation6], 0
    %14 = vsyncpa [#allocation4], 0
    // Predicated region
    $region2: #{critic_forward.1} parent=1 // pred_check
      _
    $region3: #{critic_forward.1} parent=1 // pred_check_branch
      %16 = sbr.rel (0) target = $region5
    $region4: #{critic_forward.1} parent=1 // pred_region
      _
    $region5: #{critic_forward.1} parent=1 // pred_fallthru
      _
    // Predicated region
    $region6: #{critic_forward.1} parent=1 // pred_check
      _
    $region7: #{critic_forward.1} parent=1 // pred_check_branch
      %18 = sbr.rel (0) target = $region9
    $region8: #{critic_forward.1} parent=1 // pred_region
      %20 = vsyncadd [#allocation3], 0
      %s21 = sshll.u32 %s1, 4
      %s22 = int_to_ptr.hbm [resolvable:$true] %s21
      %s23 = sshll.u32 [#allocation2], 4
      %s24 = int_to_ptr.vmem [resolvable:$true] %s23
      %29 = dma.hbm_to_vmem [thread:$0]  %s22, 1024, %s24, [#allocation3], 256, 256, 16
    $region9: #{critic_forward.1} parent=1 // pred_fallthru
      _
    // Predicated region
    $region10: #{critic_forward.1} parent=1 // pred_check
      _
    $region11: #{critic_forward.1} parent=1 // pred_check_branch
      %31 = sbr.rel (0) target = $region13
    $region12: #{critic_forward.1} parent=1 // pred_region
      _
    $region13: #{critic_forward.1} parent=1 // pred_fallthru
      _
    // Predicated region
    $region14: #{critic_forward.1} parent=1 // pred_check
      _
    $region15: #{critic_forward.1} parent=1 // pred_check_branch
      %33 = sbr.rel (0) target = $region17
    $region16: #{critic_forward.1} parent=1 // pred_region
      %35 = vsyncadd [#allocation6], 0
      %s36 = sshll.u32 %s3, 4
      %s37 = int_to_ptr.hbm [resolvable:$true] %s36
      %s38 = sshll.u32 [#allocation5], 4
      %s39 = int_to_ptr.vmem [resolvable:$true] %s38
      %44 = dma.hbm_to_vmem [thread:$0]  %s37, 8192, %s39, [#allocation6], 128, 128, 8
    $region17: #{critic_forward.1} parent=1 // pred_fallthru
      _
    // Predicated region
    $region18: #{critic_forward.1} parent=1 // pred_check
      _
    $region19: #{critic_forward.1} parent=1 // pred_check_branch
      %46 = sbr.rel (0) target = $region21
    $region20: #{critic_forward.1} parent=1 // pred_region
      _
    $region21: #{critic_forward.1} parent=1 // pred_fallthru
      _
    // Predicated region
    $region22: #{critic_forward.1} parent=1 // pred_check
      _
    $region23: #{critic_forward.1} parent=1 // pred_check_branch
      %48 = sbr.rel (0) target = $region25
    $region24: #{critic_forward.1} parent=1 // pred_region
      _
    $region25: #{critic_forward.1} parent=1 // pred_fallthru
      _
    // Predicated region
    $region26: #{critic_forward.1} parent=1 // pred_check
      _
    $region27: #{critic_forward.1} parent=1 // pred_check_branch
      %50 = sbr.rel (0) target = $region29
    $region28: #{critic_forward.1} parent=1 // pred_region
      %52 = vsyncadd [#allocation4], 0
      %s54 = sshll.u32 %s6, 4
      %s55 = int_to_ptr.vmem [resolvable:$true] %s54
      %57 = dma.vmem_to_smem %s55, 16, [#allocation7], [#allocation4]
    $region29: #{critic_forward.1} parent=1 // pred_fallthru
      _
    // Predicated region
    $region30: #{critic_forward.1} parent=1 // pred_check
      _
    $region31: #{critic_forward.1} parent=1 // pred_check_branch
      %59 = sbr.rel (0) target = $region33
    $region32: #{critic_forward.1} parent=1 // pred_region
      %61 = dma.done [#allocation3], 1024
    $region33: #{critic_forward.1} parent=1 // pred_fallthru
      _
    // Predicated region
    $region34: #{critic_forward.1} parent=1 // pred_check
      _
    $region35: #{critic_forward.1} parent=1 // pred_check_branch
      %63 = sbr.rel (0) target = $region37
    $region36: #{critic_forward.1} parent=1 // pred_region
      %65 = dma.done [#allocation6], 8192
    $region37: #{critic_forward.1} parent=1 // pred_fallthru
      _
    // Predicated region
    $region38: #{critic_forward.1} parent=1 // pred_check
      _
    $region39: #{critic_forward.1} parent=1 // pred_check_branch
      %67 = sbr.rel (0) target = $region41
    $region40: #{critic_forward.1} parent=1 // pred_region
      %69 = dma.done [#allocation4], 16
    $region41: #{critic_forward.1} parent=1 // pred_fallthru
      _
    %70 = sfence
    %v72 = vld [vmem:[%s0] sm:$0xf]
    %v73 = vld [vmem:[#allocation2] sm:$0xff]
    %v74 = vld [vmem:[#allocation2 + $0x8] sm:$0xff]
    %v75 = vld [vmem:[#allocation2 + $0x10] sm:$0xff]
    %v76 = vld [vmem:[#allocation2 + $0x18] sm:$0xff]
    %v77 = vld [vmem:[#allocation2 + $0x20] sm:$0xff]
    %v78 = vld [vmem:[#allocation2 + $0x28] sm:$0xff]
    %v79 = vld [vmem:[#allocation2 + $0x30] sm:$0xff]
    %v80 = vld [vmem:[#allocation2 + $0x38] sm:$0xff]
    %v81 = vld [vmem:[%s2] sm:$0xf]
    %v83 = vperm.slane %v81, 0
    %v84 = vperm.slane %v81, 1
    %v85 = vperm.slane %v81, 2
    %v86 = vperm.slane %v81, 3
    %v99 = vunpack.c.l.b16 %v73
    %v100 = vunpack.c.h.b16 %v73
    %v101 = vunpack.c.l.b16 %v74
    %v102 = vunpack.c.h.b16 %v74
    %v103 = vunpack.c.l.b16 %v75
    %v104 = vunpack.c.h.b16 %v75
    %v105 = vunpack.c.l.b16 %v76
    %v106 = vunpack.c.h.b16 %v76
    %v107 = vunpack.c.l.b16 %v77
    %v108 = vunpack.c.h.b16 %v77
    %v109 = vunpack.c.l.b16 %v78
    %v110 = vunpack.c.h.b16 %v78
    %v111 = vunpack.c.l.b16 %v79
    %v112 = vunpack.c.h.b16 %v79
    %v113 = vunpack.c.l.b16 %v80
    %v114 = vunpack.c.h.b16 %v80
    %v115 = vpack.c.b16 %v103, %v99
    %v116 = vpack.c.b16 %v104, %v100
    %v117 = vpack.c.b16 %v105, %v101
    %v118 = vpack.c.b16 %v106, %v102
    %v119 = vpack.c.b16 %v111, %v107
    %v120 = vpack.c.b16 %v112, %v108
    %v121 = vpack.c.b16 %v113, %v109
    %v122 = vpack.c.b16 %v114, %v110
    %vm131 = vcmask 261120
    %v133 = vsel %vm131, %v72, 0
    %135 = vmatpush.bf16.msra.mxu0 0
    %136 = vmatpush.bf16.msra.mxu0 0
    %137 = vmatpush.bf16.msra.mxu0 0
    %138 = vmatpush.bf16.msra.mxu0 0
    %139 = vmatpush.bf16.msra.mxu0 0
    %140 = vmatpush.bf16.msra.mxu0 0
    %141 = vmatpush.bf16.msra.mxu0 %v119
    %142 = vmatpush.bf16.msra.mxu0 %v115
    %143 = vmatmul.bf16.gmra.mxu0 %v133
    %v144 = vpop.f32.mrf.mxu0
    %v145 = vadd.f32 %v83, %v144
    %v146 = vpop.f32.mrf.mxu0
    %147 = vdwg.mxu0
    %148 = vmatpush.bf16.msra.mxu0 0
    %149 = vmatpush.bf16.msra.mxu0 0
    %150 = vmatpush.bf16.msra.mxu0 0
    %151 = vmatpush.bf16.msra.mxu0 0
    %152 = vmatpush.bf16.msra.mxu0 0
    %153 = vmatpush.bf16.msra.mxu0 0
    %154 = vmatpush.bf16.msra.mxu0 %v120
    %155 = vmatpush.bf16.msra.mxu0 %v116
    %156 = vmatmul.bf16.gmra.mxu0 %v133
    %v157 = vpop.f32.mrf.mxu0
    %v158 = vadd.f32 %v84, %v157
    %v159 = vpop.f32.mrf.mxu0
    %160 = vdwg.mxu0
    %161 = vmatpush.bf16.msra.mxu0 0
    %162 = vmatpush.bf16.msra.mxu0 0
    %163 = vmatpush.bf16.msra.mxu0 0
    %164 = vmatpush.bf16.msra.mxu0 0
    %165 = vmatpush.bf16.msra.mxu0 0
    %166 = vmatpush.bf16.msra.mxu0 0
    %167 = vmatpush.bf16.msra.mxu0 %v121
    %168 = vmatpush.bf16.msra.mxu0 %v117
    %169 = vmatmul.bf16.gmra.mxu0 %v133
    %v170 = vpop.f32.mrf.mxu0
    %v171 = vadd.f32 %v85, %v170
    %v172 = vpop.f32.mrf.mxu0
    %173 = vdwg.mxu0
    %174 = vmatpush.bf16.msra.mxu0 0
    %175 = vmatpush.bf16.msra.mxu0 0
    %176 = vmatpush.bf16.msra.mxu0 0
    %177 = vmatpush.bf16.msra.mxu0 0
    %178 = vmatpush.bf16.msra.mxu0 0
    %179 = vmatpush.bf16.msra.mxu0 0
    %180 = vmatpush.bf16.msra.mxu0 %v122
    %181 = vmatpush.bf16.msra.mxu0 %v118
    %182 = vmatmul.bf16.gmra.mxu0 %v133
    %v183 = vpop.f32.mrf.mxu0
    %v184 = vadd.f32 %v86, %v183
    %v185 = vpop.f32.mrf.mxu0
    %186 = vdwg.mxu0
    %v187 = vmax.f32 %v145, 0.0
    %v188 = vmax.f32 %v158, 0.0
    %v189 = vmax.f32 %v171, 0.0
    %v190 = vmax.f32 %v184, 0.0
    %v191 = vpack.c.bf16 %v187, %v187
    %v192 = vpack.c.bf16 %v188, %v188
    %v193 = vpack.c.bf16 %v189, %v189
    %v194 = vpack.c.bf16 %v190, %v190
    %v195 = vld [vmem:[#allocation5] sm:$0xff]
    %v196 = vld [vmem:[#allocation5 + $0x8] sm:$0xff]
    %v197 = vld [vmem:[#allocation5 + $0x10] sm:$0xff]
    %v198 = vld [vmem:[#allocation5 + $0x18] sm:$0xff]
    %v199 = vld [vmem:[#allocation5 + $0x20] sm:$0xff]
    %v200 = vld [vmem:[#allocation5 + $0x28] sm:$0xff]
    %v201 = vld [vmem:[#allocation5 + $0x30] sm:$0xff]
    %v202 = vld [vmem:[#allocation5 + $0x38] sm:$0xff]
    %v203 = vld [vmem:[#allocation5 + $0x40] sm:$0xff]
    %v204 = vld [vmem:[#allocation5 + $0x48] sm:$0xff]
    %v205 = vld [vmem:[#allocation5 + $0x50] sm:$0xff]
    %v206 = vld [vmem:[#allocation5 + $0x58] sm:$0xff]
    %v207 = vld [vmem:[#allocation5 + $0x60] sm:$0xff]
    %v208 = vld [vmem:[#allocation5 + $0x68] sm:$0xff]
    %v209 = vld [vmem:[#allocation5 + $0x70] sm:$0xff]
    %v210 = vld [vmem:[#allocation5 + $0x78] sm:$0xff]
    %v211 = vld [vmem:[#allocation5 + $0x80] sm:$0xff]
    %v212 = vld [vmem:[#allocation5 + $0x88] sm:$0xff]
    %v213 = vld [vmem:[#allocation5 + $0x90] sm:$0xff]
    %v214 = vld [vmem:[#allocation5 + $0x98] sm:$0xff]
    %v215 = vld [vmem:[#allocation5 + $0xa0] sm:$0xff]
    %v216 = vld [vmem:[#allocation5 + $0xa8] sm:$0xff]
    %v217 = vld [vmem:[#allocation5 + $0xb0] sm:$0xff]
    %v218 = vld [vmem:[#allocation5 + $0xb8] sm:$0xff]
    %v219 = vld [vmem:[#allocation5 + $0xc0] sm:$0xff]
    %v220 = vld [vmem:[#allocation5 + $0xc8] sm:$0xff]
    %v221 = vld [vmem:[#allocation5 + $0xd0] sm:$0xff]
    %v222 = vld [vmem:[#allocation5 + $0xd8] sm:$0xff]
    %v223 = vld [vmem:[#allocation5 + $0xe0] sm:$0xff]
    %v224 = vld [vmem:[#allocation5 + $0xe8] sm:$0xff]
    %v225 = vld [vmem:[#allocation5 + $0xf0] sm:$0xff]
    %v226 = vld [vmem:[#allocation5 + $0xf8] sm:$0xff]
    %v227 = vld [vmem:[%s4] sm:$0x3]
    %v229 = vperm.slane %v227, 0
    %v230 = vperm.slane %v227, 1
    %v265 = vunpack.c.l.b16 %v195
    %v266 = vunpack.c.h.b16 %v195
    %v267 = vunpack.c.l.b16 %v196
    %v268 = vunpack.c.h.b16 %v196
    %v269 = vunpack.c.l.b16 %v197
    %v270 = vunpack.c.h.b16 %v197
    %v271 = vunpack.c.l.b16 %v198
    %v272 = vunpack.c.h.b16 %v198
    %v273 = vunpack.c.l.b16 %v199
    %v274 = vunpack.c.h.b16 %v199
    %v275 = vunpack.c.l.b16 %v200
    %v276 = vunpack.c.h.b16 %v200
    %v277 = vunpack.c.l.b16 %v201
    %v278 = vunpack.c.h.b16 %v201
    %v279 = vunpack.c.l.b16 %v202
    %v280 = vunpack.c.h.b16 %v202
    %v281 = vunpack.c.l.b16 %v203
    %v282 = vunpack.c.h.b16 %v203
    %v283 = vunpack.c.l.b16 %v204
    %v284 = vunpack.c.h.b16 %v204
    %v285 = vunpack.c.l.b16 %v205
    %v286 = vunpack.c.h.b16 %v205
    %v287 = vunpack.c.l.b16 %v206
    %v288 = vunpack.c.h.b16 %v206
    %v289 = vunpack.c.l.b16 %v207
    %v290 = vunpack.c.h.b16 %v207
    %v291 = vunpack.c.l.b16 %v208
    %v292 = vunpack.c.h.b16 %v208
    %v293 = vunpack.c.l.b16 %v209
    %v294 = vunpack.c.h.b16 %v209
    %v295 = vunpack.c.l.b16 %v210
    %v296 = vunpack.c.h.b16 %v210
    %v297 = vunpack.c.l.b16 %v211
    %v298 = vunpack.c.h.b16 %v211
    %v299 = vunpack.c.l.b16 %v212
    %v300 = vunpack.c.h.b16 %v212
    %v301 = vunpack.c.l.b16 %v213
    %v302 = vunpack.c.h.b16 %v213
    %v303 = vunpack.c.l.b16 %v214
    %v304 = vunpack.c.h.b16 %v214
    %v305 = vunpack.c.l.b16 %v215
    %v306 = vunpack.c.h.b16 %v215
    %v307 = vunpack.c.l.b16 %v216
    %v308 = vunpack.c.h.b16 %v216
    %v309 = vunpack.c.l.b16 %v217
    %v310 = vunpack.c.h.b16 %v217
    %v311 = vunpack.c.l.b16 %v218
    %v312 = vunpack.c.h.b16 %v218
    %v313 = vunpack.c.l.b16 %v219
    %v314 = vunpack.c.h.b16 %v219
    %v315 = vunpack.c.l.b16 %v220
    %v316 = vunpack.c.h.b16 %v220
    %v317 = vunpack.c.l.b16 %v221
    %v318 = vunpack.c.h.b16 %v221
    %v319 = vunpack.c.l.b16 %v222
    %v320 = vunpack.c.h.b16 %v222
    %v321 = vunpack.c.l.b16 %v223
    %v322 = vunpack.c.h.b16 %v223
    %v323 = vunpack.c.l.b16 %v224
    %v324 = vunpack.c.h.b16 %v224
    %v325 = vunpack.c.l.b16 %v225
    %v326 = vunpack.c.h.b16 %v225
    %v327 = vunpack.c.l.b16 %v226
    %v328 = vunpack.c.h.b16 %v226
    %v329 = vpack.c.b16 %v267, %v265
    %v330 = vpack.c.b16 %v268, %v266
    %v331 = vpack.c.b16 %v271, %v269
    %v332 = vpack.c.b16 %v272, %v270
    %v333 = vpack.c.b16 %v275, %v273
    %v334 = vpack.c.b16 %v276, %v274
    %v335 = vpack.c.b16 %v279, %v277
    %v336 = vpack.c.b16 %v280, %v278
    %v337 = vpack.c.b16 %v283, %v281
    %v338 = vpack.c.b16 %v284, %v282
    %v339 = vpack.c.b16 %v287, %v285
    %v340 = vpack.c.b16 %v288, %v286
    %v341 = vpack.c.b16 %v291, %v289
    %v342 = vpack.c.b16 %v292, %v290
    %v343 = vpack.c.b16 %v295, %v293
    %v344 = vpack.c.b16 %v296, %v294
    %v345 = vpack.c.b16 %v299, %v297
    %v346 = vpack.c.b16 %v300, %v298
    %v347 = vpack.c.b16 %v303, %v301
    %v348 = vpack.c.b16 %v304, %v302
    %v349 = vpack.c.b16 %v307, %v305
    %v350 = vpack.c.b16 %v308, %v306
    %v351 = vpack.c.b16 %v311, %v309
    %v352 = vpack.c.b16 %v312, %v310
    %v353 = vpack.c.b16 %v315, %v313
    %v354 = vpack.c.b16 %v316, %v314
    %v355 = vpack.c.b16 %v319, %v317
    %v356 = vpack.c.b16 %v320, %v318
    %v357 = vpack.c.b16 %v323, %v321
    %v358 = vpack.c.b16 %v324, %v322
    %v359 = vpack.c.b16 %v327, %v325
    %v360 = vpack.c.b16 %v328, %v326
    %393 = vmatpush.bf16.msra.mxu0 %v343
    %394 = vmatpush.bf16.msra.mxu0 %v341
    %395 = vmatpush.bf16.msra.mxu0 %v339
    %396 = vmatpush.bf16.msra.mxu0 %v337
    %397 = vmatpush.bf16.msra.mxu0 %v335
    %398 = vmatpush.bf16.msra.mxu0 %v333
    %399 = vmatpush.bf16.msra.mxu0 %v331
    %400 = vmatpush.bf16.msra.mxu0 %v329
    %401 = vmatmul.bf16.gmra.mxu0 %v191
    %v402 = vpop.f32.mrf.mxu0
    %v403 = vadd.f32 %v229, %v402
    %v404 = vpop.f32.mrf.mxu0
    %405 = vdwg.mxu0
    %406 = vmatpush.bf16.msra.mxu0 %v359
    %407 = vmatpush.bf16.msra.mxu0 %v357
    %408 = vmatpush.bf16.msra.mxu0 %v355
    %409 = vmatpush.bf16.msra.mxu0 %v353
    %410 = vmatpush.bf16.msra.mxu0 %v351
    %411 = vmatpush.bf16.msra.mxu0 %v349
    %412 = vmatpush.bf16.msra.mxu0 %v347
    %413 = vmatpush.bf16.msra.mxu0 %v345
    %414 = vmatmul.bf16.gmra.mxu0 %v192
    %v415 = vpop.f32.mrf.mxu0
    %v416 = vadd.f32 %v403, %v415
    %v417 = vpop.f32.mrf.mxu0
    %418 = vdwg.mxu0
    %419 = vmatpush.bf16.msra.mxu0 %v344
    %420 = vmatpush.bf16.msra.mxu0 %v342
    %421 = vmatpush.bf16.msra.mxu0 %v340
    %422 = vmatpush.bf16.msra.mxu0 %v338
    %423 = vmatpush.bf16.msra.mxu0 %v336
    %424 = vmatpush.bf16.msra.mxu0 %v334
    %425 = vmatpush.bf16.msra.mxu0 %v332
    %426 = vmatpush.bf16.msra.mxu0 %v330
    %427 = vmatmul.bf16.gmra.mxu0 %v191
    %v428 = vpop.f32.mrf.mxu0
    %v429 = vadd.f32 %v230, %v428
    %v430 = vpop.f32.mrf.mxu0
    %431 = vdwg.mxu0
    %432 = vmatpush.bf16.msra.mxu0 %v360
    %433 = vmatpush.bf16.msra.mxu0 %v358
    %434 = vmatpush.bf16.msra.mxu0 %v356
    %435 = vmatpush.bf16.msra.mxu0 %v354
    %436 = vmatpush.bf16.msra.mxu0 %v352
    %437 = vmatpush.bf16.msra.mxu0 %v350
    %438 = vmatpush.bf16.msra.mxu0 %v348
    %439 = vmatpush.bf16.msra.mxu0 %v346
    %440 = vmatmul.bf16.gmra.mxu0 %v192
    %v441 = vpop.f32.mrf.mxu0
    %v442 = vadd.f32 %v429, %v441
    %v443 = vpop.f32.mrf.mxu0
    %444 = vdwg.mxu0
    %v445 = vmax.f32 %v416, 0.0
    %v446 = vmax.f32 %v442, 0.0
    %s447 = scalar_lea.vmem [#allocation5], 256
    %v448 = vld [vmem:[%s447] sm:$0xff]
    %v449 = vld [vmem:[%s447 + $0x8] sm:$0xff]
    %v450 = vld [vmem:[%s447 + $0x10] sm:$0xff]
    %v451 = vld [vmem:[%s447 + $0x18] sm:$0xff]
    %v452 = vld [vmem:[%s447 + $0x20] sm:$0xff]
    %v453 = vld [vmem:[%s447 + $0x28] sm:$0xff]
    %v454 = vld [vmem:[%s447 + $0x30] sm:$0xff]
    %v455 = vld [vmem:[%s447 + $0x38] sm:$0xff]
    %v456 = vld [vmem:[%s447 + $0x40] sm:$0xff]
    %v457 = vld [vmem:[%s447 + $0x48] sm:$0xff]
    %v458 = vld [vmem:[%s447 + $0x50] sm:$0xff]
    %v459 = vld [vmem:[%s447 + $0x58] sm:$0xff]
    %v460 = vld [vmem:[%s447 + $0x60] sm:$0xff]
    %v461 = vld [vmem:[%s447 + $0x68] sm:$0xff]
    %v462 = vld [vmem:[%s447 + $0x70] sm:$0xff]
    %v463 = vld [vmem:[%s447 + $0x78] sm:$0xff]
    %v464 = vld [vmem:[%s447 + $0x80] sm:$0xff]
    %v465 = vld [vmem:[%s447 + $0x88] sm:$0xff]
    %v466 = vld [vmem:[%s447 + $0x90] sm:$0xff]
    %v467 = vld [vmem:[%s447 + $0x98] sm:$0xff]
    %v468 = vld [vmem:[%s447 + $0xa0] sm:$0xff]
    %v469 = vld [vmem:[%s447 + $0xa8] sm:$0xff]
    %v470 = vld [vmem:[%s447 + $0xb0] sm:$0xff]
    %v471 = vld [vmem:[%s447 + $0xb8] sm:$0xff]
    %v472 = vld [vmem:[%s447 + $0xc0] sm:$0xff]
    %v473 = vld [vmem:[%s447 + $0xc8] sm:$0xff]
    %v474 = vld [vmem:[%s447 + $0xd0] sm:$0xff]
    %v475 = vld [vmem:[%s447 + $0xd8] sm:$0xff]
    %v476 = vld [vmem:[%s447 + $0xe0] sm:$0xff]
    %v477 = vld [vmem:[%s447 + $0xe8] sm:$0xff]
    %v478 = vld [vmem:[%s447 + $0xf0] sm:$0xff]
    %v479 = vld [vmem:[%s447 + $0xf8] sm:$0xff]
    %v480 = vld [vmem:[%s4 + $0x2] sm:$0x3]
    %v482 = vperm.slane %v480, 0
    %v483 = vperm.slane %v480, 1
    %v518 = vunpack.c.l.b16 %v448
    %v519 = vunpack.c.h.b16 %v448
    %v520 = vunpack.c.l.b16 %v449
    %v521 = vunpack.c.h.b16 %v449
    %v522 = vunpack.c.l.b16 %v450
    %v523 = vunpack.c.h.b16 %v450
    %v524 = vunpack.c.l.b16 %v451
    %v525 = vunpack.c.h.b16 %v451
    %v526 = vunpack.c.l.b16 %v452
    %v527 = vunpack.c.h.b16 %v452
    %v528 = vunpack.c.l.b16 %v453
    %v529 = vunpack.c.h.b16 %v453
    %v530 = vunpack.c.l.b16 %v454
    %v531 = vunpack.c.h.b16 %v454
    %v532 = vunpack.c.l.b16 %v455
    %v533 = vunpack.c.h.b16 %v455
    %v534 = vunpack.c.l.b16 %v456
    %v535 = vunpack.c.h.b16 %v456
    %v536 = vunpack.c.l.b16 %v457
    %v537 = vunpack.c.h.b16 %v457
    %v538 = vunpack.c.l.b16 %v458
    %v539 = vunpack.c.h.b16 %v458
    %v540 = vunpack.c.l.b16 %v459
    %v541 = vunpack.c.h.b16 %v459
    %v542 = vunpack.c.l.b16 %v460
    %v543 = vunpack.c.h.b16 %v460
    %v544 = vunpack.c.l.b16 %v461
    %v545 = vunpack.c.h.b16 %v461
    %v546 = vunpack.c.l.b16 %v462
    %v547 = vunpack.c.h.b16 %v462
    %v548 = vunpack.c.l.b16 %v463
    %v549 = vunpack.c.h.b16 %v463
    %v550 = vunpack.c.l.b16 %v464
    %v551 = vunpack.c.h.b16 %v464
    %v552 = vunpack.c.l.b16 %v465
    %v553 = vunpack.c.h.b16 %v465
    %v554 = vunpack.c.l.b16 %v466
    %v555 = vunpack.c.h.b16 %v466
    %v556 = vunpack.c.l.b16 %v467
    %v557 = vunpack.c.h.b16 %v467
    %v558 = vunpack.c.l.b16 %v468
    %v559 = vunpack.c.h.b16 %v468
    %v560 = vunpack.c.l.b16 %v469
    %v561 = vunpack.c.h.b16 %v469
    %v562 = vunpack.c.l.b16 %v470
    %v563 = vunpack.c.h.b16 %v470
    %v564 = vunpack.c.l.b16 %v471
    %v565 = vunpack.c.h.b16 %v471
    %v566 = vunpack.c.l.b16 %v472
    %v567 = vunpack.c.h.b16 %v472
    %v568 = vunpack.c.l.b16 %v473
    %v569 = vunpack.c.h.b16 %v473
    %v570 = vunpack.c.l.b16 %v474
    %v571 = vunpack.c.h.b16 %v474
    %v572 = vunpack.c.l.b16 %v475
    %v573 = vunpack.c.h.b16 %v475
    %v574 = vunpack.c.l.b16 %v476
    %v575 = vunpack.c.h.b16 %v476
    %v576 = vunpack.c.l.b16 %v477
    %v577 = vunpack.c.h.b16 %v477
    %v578 = vunpack.c.l.b16 %v478
    %v579 = vunpack.c.h.b16 %v478
    %v580 = vunpack.c.l.b16 %v479
    %v581 = vunpack.c.h.b16 %v479
    %v582 = vpack.c.b16 %v520, %v518
    %v583 = vpack.c.b16 %v521, %v519
    %v584 = vpack.c.b16 %v524, %v522
    %v585 = vpack.c.b16 %v525, %v523
    %v586 = vpack.c.b16 %v528, %v526
    %v587 = vpack.c.b16 %v529, %v527
    %v588 = vpack.c.b16 %v532, %v530
    %v589 = vpack.c.b16 %v533, %v531
    %v590 = vpack.c.b16 %v536, %v534
    %v591 = vpack.c.b16 %v537, %v535
    %v592 = vpack.c.b16 %v540, %v538
    %v593 = vpack.c.b16 %v541, %v539
    %v594 = vpack.c.b16 %v544, %v542
    %v595 = vpack.c.b16 %v545, %v543
    %v596 = vpack.c.b16 %v548, %v546
    %v597 = vpack.c.b16 %v549, %v547
    %v598 = vpack.c.b16 %v552, %v550
    %v599 = vpack.c.b16 %v553, %v551
    %v600 = vpack.c.b16 %v556, %v554
    %v601 = vpack.c.b16 %v557, %v555
    %v602 = vpack.c.b16 %v560, %v558
    %v603 = vpack.c.b16 %v561, %v559
    %v604 = vpack.c.b16 %v564, %v562
    %v605 = vpack.c.b16 %v565, %v563
    %v606 = vpack.c.b16 %v568, %v566
    %v607 = vpack.c.b16 %v569, %v567
    %v608 = vpack.c.b16 %v572, %v570
    %v609 = vpack.c.b16 %v573, %v571
    %v610 = vpack.c.b16 %v576, %v574
    %v611 = vpack.c.b16 %v577, %v575
    %v612 = vpack.c.b16 %v580, %v578
    %v613 = vpack.c.b16 %v581, %v579
    %646 = vmatpush.bf16.msra.mxu0 %v596
    %647 = vmatpush.bf16.msra.mxu0 %v594
    %648 = vmatpush.bf16.msra.mxu0 %v592
    %649 = vmatpush.bf16.msra.mxu0 %v590
    %650 = vmatpush.bf16.msra.mxu0 %v588
    %651 = vmatpush.bf16.msra.mxu0 %v586
    %652 = vmatpush.bf16.msra.mxu0 %v584
    %653 = vmatpush.bf16.msra.mxu0 %v582
    %654 = vmatmul.bf16.gmra.mxu0 %v193
    %v655 = vpop.f32.mrf.mxu0
    %v656 = vadd.f32 %v482, %v655
    %v657 = vpop.f32.mrf.mxu0
    %658 = vdwg.mxu0
    %659 = vmatpush.bf16.msra.mxu0 %v612
    %660 = vmatpush.bf16.msra.mxu0 %v610
    %661 = vmatpush.bf16.msra.mxu0 %v608
    %662 = vmatpush.bf16.msra.mxu0 %v606
    %663 = vmatpush.bf16.msra.mxu0 %v604
    %664 = vmatpush.bf16.msra.mxu0 %v602
    %665 = vmatpush.bf16.msra.mxu0 %v600
    %666 = vmatpush.bf16.msra.mxu0 %v598
    %667 = vmatmul.bf16.gmra.mxu0 %v194
    %v668 = vpop.f32.mrf.mxu0
    %v669 = vadd.f32 %v656, %v668
    %v670 = vpop.f32.mrf.mxu0
    %671 = vdwg.mxu0
    %672 = vmatpush.bf16.msra.mxu0 %v597
    %673 = vmatpush.bf16.msra.mxu0 %v595
    %674 = vmatpush.bf16.msra.mxu0 %v593
    %675 = vmatpush.bf16.msra.mxu0 %v591
    %676 = vmatpush.bf16.msra.mxu0 %v589
    %677 = vmatpush.bf16.msra.mxu0 %v587
    %678 = vmatpush.bf16.msra.mxu0 %v585
    %679 = vmatpush.bf16.msra.mxu0 %v583
    %680 = vmatmul.bf16.gmra.mxu0 %v193
    %v681 = vpop.f32.mrf.mxu0
    %v682 = vadd.f32 %v483, %v681
    %v683 = vpop.f32.mrf.mxu0
    %684 = vdwg.mxu0
    %685 = vmatpush.bf16.msra.mxu0 %v613
    %686 = vmatpush.bf16.msra.mxu0 %v611
    %687 = vmatpush.bf16.msra.mxu0 %v609
    %688 = vmatpush.bf16.msra.mxu0 %v607
    %689 = vmatpush.bf16.msra.mxu0 %v605
    %690 = vmatpush.bf16.msra.mxu0 %v603
    %691 = vmatpush.bf16.msra.mxu0 %v601
    %692 = vmatpush.bf16.msra.mxu0 %v599
    %693 = vmatmul.bf16.gmra.mxu0 %v194
    %v694 = vpop.f32.mrf.mxu0
    %v695 = vadd.f32 %v682, %v694
    %v696 = vpop.f32.mrf.mxu0
    %697 = vdwg.mxu0
    %v698 = vmax.f32 %v669, 0.0
    %v699 = vmax.f32 %v695, 0.0
    %v700 = vld [vmem:[%s5] ss:$2 sm:$0x3]
    %v702 = vperm.slane %v700, 0
    %v703 = vperm.slane %v700, 1
    %v706 = vmul.f32 %v445, %v702
    %v707 = vmul.f32 %v446, %v703
    %v708 = vadd.f32 %v706, %v707
    %709 = vadd.xlane.f32.xlu0 %v708
    %v710 = vpop.xlane.xlu0 %709
    %s711 = sld [smem:[#allocation7]]
    %v712 = vstv %s711
    %v713 = vadd.f32 %v710, %v712
    %vm714 = vcmask 7168
    %715 = vst.msk [vmem:[%s7] sm:$0xff] %vm714, %v713
    %s716 = scalar_lea.vmem %s5, 1
    %v717 = vld [vmem:[%s716] ss:$2 sm:$0x3]
    %v719 = vperm.slane %v717, 0
    %v720 = vperm.slane %v717, 1
    %v723 = vmul.f32 %v698, %v719
    %v724 = vmul.f32 %v699, %v720
    %v725 = vadd.f32 %v723, %v724
    %726 = vadd.xlane.f32.xlu0 %v725
    %v727 = vpop.xlane.xlu0 %726
    %s728 = sld [smem:[#allocation7 + $0x1]]
    %v729 = vstv %s728
    %v730 = vadd.f32 %v727, %v729
    %vm731 = vcmask 15368
    %732 = vst.msk [vmem:[%s7] sm:$0xff] %vm731, %v730
    // Predicated region
    $region42: #{critic_forward.1} parent=1 // pred_check
      _
    $region43: #{critic_forward.1} parent=1 // pred_check_branch
      %734 = sbr.rel (0) target = $region45
    $region44: #{critic_forward.1} parent=1 // pred_region
      _
    $region45: #{critic_forward.1} parent=1 // pred_fallthru
      _
    // Predicated region
    $region46: #{critic_forward.1} parent=1 // pred_check
      _
    $region47: #{critic_forward.1} parent=1 // pred_check_branch
      %736 = sbr.rel (0) target = $region49
    $region48: #{critic_forward.1} parent=1 // pred_region
      _
    $region49: #{critic_forward.1} parent=1 // pred_fallthru
      _
    %737 = vsyncpa [#allocation3], 1
    %738 = vsyncpa [#allocation6], 1
    %739 = vsyncpa [#allocation4], 1

</llo_original>
